<compile_context>
chip_gen: v5e
topology: v5e:2x2
jax: 0.10.0
libtpu: 0.0.40
codegen_flags: <defaults>
</compile_context>

<pallas_src>
import functools

import jax
import jax.numpy as jnp
from jax import lax
from jax.experimental import pallas as pl
from jax.experimental.pallas import tpu as pltpu

_LANES = 128
_SUBLANES = 8
# Max rows-of-128-lanes per grid step.  4096 rows x 128 lanes x 4 B = 2 MiB
# per f32 input block; x2 inputs x2 pipeline buffers = 8 MiB -> safe under the
# default scoped-VMEM limit on v5e/v6e/v7x with no vmem_limit_bytes override.
_MAX_BLOCK_ROWS = 4096
_LN2 = 0.6931471805599453


def _stable_logcosh(d):
    """Numerically stable log(cosh(d)) = |d| + log1p(exp(-2|d|)) - log(2)."""
    ad = jnp.abs(d)
    return ad + jnp.log1p(jnp.exp(-2.0 * ad)) - jnp.float32(_LN2)


def _tile_sum(vals, block_rows):
    """(block_rows, 128) f32 -> (8, 128) partial-sum tile.

    Two-level tree of vreg-wise VPU adds so the dependency chain stays short
    (~7 + block_rows/64 adds instead of block_rows/8 - 1 chained adds).
    """
    g = block_rows // _SUBLANES
    x = vals.reshape(g, _SUBLANES, _LANES)
    if g > 8 and g % 8 == 0:
        x = x.reshape(g // 8, 8, _SUBLANES, _LANES).sum(axis=1)
    return x.sum(axis=0)


def _logcosh_partial_kernel(x_ref, y_ref, o_ref, *, block_rows,
                            last_valid_rows, mask_last):
    """Partial sum of log(cosh(x - y)) for one block, as an (8,128) f32 tile."""
    d = x_ref[...].astype(jnp.float32) - y_ref[...].astype(jnp.float32)
    lc = _stable_logcosh(d)

    if mask_last:
        is_last = pl.program_id(0) == pl.num_programs(0) - 1

        @pl.when(is_last)
        def _():
            # Only the final (partial) block carries out-of-bounds rows whose
            # VMEM contents are undefined.  jnp.where *selects* -- do not
            # rewrite as a multiply-by-0: the discarded rows may hold NaN.
            row = lax.broadcasted_iota(jnp.int32, (block_rows, _LANES), 0)
            o_ref[...] = _tile_sum(
                jnp.where(row < last_valid_rows, lc, 0.0), block_rows)

        @pl.when(jnp.logical_not(is_last))
        def _():
            o_ref[...] = _tile_sum(lc, block_rows)
    else:
        o_ref[...] = _tile_sum(lc, block_rows)


def logcosh_loss(y_pred, y_true):
    assert y_pred.shape == y_true.shape
    n_elements = int(y_pred.size)

    xp = jnp.ravel(y_pred)  # keep original dtype on the wire; upcast in-kernel
    yt = jnp.ravel(y_true)

    # Row alignment so every (row, 128) block is a legal packed tile:
    # f32 -> 8 rows, bf16 -> 16 rows, int8/fp8 -> 32 rows.
    itemsize = jnp.dtype(y_pred.dtype).itemsize
    row_align = _SUBLANES * max(1, 4 // itemsize)
    chunk = row_align * _LANES

    # Largest aligned prefix handled by the kernel; sub-chunk tail in plain
    # jnp.  For typical NN shapes (multiple of chunk, incl. the demo) the
    # prefix is the whole array and the slice/reshape below are free bitcasts.
    main_elems = (n_elements // chunk) * chunk
    rows = main_elems // _LANES

    main_sum = jnp.float32(0.0)
    if rows > 0:
        # Block selection: largest block <= _MAX_BLOCK_ROWS, but when the
        # whole prefix would be a single step, split it into two balanced
        # blocks so v7x's two TensorCores both get work.
        if rows <= _MAX_BLOCK_ROWS:
            block_rows = pl.cdiv(pl.cdiv(rows, 2), row_align) * row_align
        else:
            block_rows = _MAX_BLOCK_ROWS
        block_rows = min(block_rows, rows)
        n_steps = pl.cdiv(rows, block_rows)
        last_valid_rows = rows - (n_steps - 1) * block_rows
        mask_last = last_valid_rows != block_rows

        kernel = functools.partial(
            _logcosh_partial_kernel,
            block_rows=block_rows,
            last_valid_rows=last_valid_rows,
            mask_last=mask_last,
        )

        cost = pl.CostEstimate(
            flops=6 * main_elems,
            transcendentals=2 * main_elems,
            bytes_accessed=2 * main_elems * itemsize
            + n_steps * _SUBLANES * _LANES * 4,
        )

        partials = pl.pallas_call(
            kernel,
            out_shape=jax.ShapeDtypeStruct((n_steps * _SUBLANES, _LANES),
                                           jnp.float32),
            grid_spec=pltpu.PrefetchScalarGridSpec(
                num_scalar_prefetch=0,
                grid=(n_steps,),
                in_specs=[
                    pl.BlockSpec((block_rows, _LANES), lambda i: (i, 0)),
                    pl.BlockSpec((block_rows, _LANES), lambda i: (i, 0)),
                ],
                out_specs=pl.BlockSpec((_SUBLANES, _LANES), lambda i: (i, 0)),
            ),
            compiler_params=pltpu.CompilerParams(
                # Blocks are fully independent -> megacore split on v7x.
                dimension_semantics=("parallel",),
            ),
            cost_estimate=cost,
        )(xp[:main_elems].reshape(rows, _LANES),
          yt[:main_elems].reshape(rows, _LANES))

        # Tiny final reduce over (n_steps*8, 128) f32 outside the kernel.
        main_sum = jnp.sum(partials)

    tail_sum = jnp.float32(0.0)
    if main_elems != n_elements:
        d_tail = (xp[main_elems:].astype(jnp.float32)
                  - yt[main_elems:].astype(jnp.float32))
        tail_sum = jnp.sum(_stable_logcosh(d_tail))

    return (main_sum + tail_sum) / jnp.float32(n_elements)


if __name__ == "__main__":
    key = jax.random.PRNGKey(0)
    k1, k2 = jax.random.split(key)
    # Small NCHW-shaped predictions/targets, consistent with a regression head.
    y_pred = jax.random.normal(k1, (2, 4, 16, 16), dtype=jnp.float32)
    y_true = jax.random.normal(k2, (2, 4, 16, 16), dtype=jnp.float32)

    loss = logcosh_loss(y_pred, y_true)
    jax.block_until_ready(loss)

    # Pure-JAX reference (same math as torch.log(torch.cosh(.)).mean()).
    ref = jnp.mean(jnp.log(jnp.cosh(y_pred - y_true)))
    assert jnp.allclose(loss, ref, atol=1e-5, rtol=1e-5), (loss, ref)

    # Extra check on a shape that exercises multiple grid steps and the
    # non-aligned tail path.
    k3, k4 = jax.random.split(k1)
    a = jax.random.normal(k3, (3, 5, 37, 41), dtype=jnp.float32)
    b = jax.random.normal(k4, (3, 5, 37, 41), dtype=jnp.float32)
    loss2 = logcosh_loss(a, b)
    jax.block_until_ready(loss2)
    ref2 = jnp.mean(jnp.log(jnp.cosh(a - b)))
    assert jnp.allclose(loss2, ref2, atol=1e-5, rtol=1e-5), (loss2, ref2)

    print("KERNEL_OK")
</pallas_src>

<mosaic_0001>
module attributes {stable_mosaic.version = 11 : i64} {
  func.func @_logcosh_partial_kernel(%arg0: i32, %arg1: memref<8x128xf32, #tpu.memory_space<vmem>>, %arg2: memref<8x128xf32, #tpu.memory_space<vmem>>, %arg3: memref<8x128xf32, #tpu.memory_space<vmem>>) attributes {dimension_semantics = [#tpu.dimension_semantics<parallel>], iteration_bounds = array<i64: 2>, scalar_prefetch = 0 : i64, scratch_operands = 0 : i64, tpu.core_type = #tpu.core_type<tc>, window_params = [{transform_indices = @transform_0, window_bounds = array<i64: 8, 128>}, {transform_indices = @transform_1, window_bounds = array<i64: 8, 128>}, {transform_indices = @transform_2, window_bounds = array<i64: 8, 128>}]} {
    %c0 = arith.constant 0 : index
    %c0_0 = arith.constant 0 : index
    %0 = vector.load %arg1[%c0, %c0_0] : memref<8x128xf32, #tpu.memory_space<vmem>>, vector<8x128xf32>
    %c0_1 = arith.constant 0 : index
    %c0_2 = arith.constant 0 : index
    %1 = vector.load %arg2[%c0_1, %c0_2] : memref<8x128xf32, #tpu.memory_space<vmem>>, vector<8x128xf32>
    %2 = arith.subf %0, %1 : vector<8x128xf32>
    %3 = math.absf %2 : vector<8x128xf32>
    %cst = arith.constant -2.000000e+00 : f32
    %4 = vector.broadcast %cst : f32 to vector<8x128xf32>
    %5 = arith.mulf %4, %3 : vector<8x128xf32>
    %6 = math.exp %5 : vector<8x128xf32>
    %7 = math.log1p %6 : vector<8x128xf32>
    %8 = arith.addf %3, %7 : vector<8x128xf32>
    %cst_3 = arith.constant 0.693147182 : f32
    %9 = vector.broadcast %cst_3 : f32 to vector<8x128xf32>
    %10 = arith.subf %8, %9 : vector<8x128xf32>
    %11 = vector.shape_cast %10 : vector<8x128xf32> to vector<1x8x128xf32>
    %cst_4 = arith.constant dense<0.000000e+00> : vector<8x128xf32>
    %12 = vector.multi_reduction <add>, %11, %cst_4 [0] : vector<1x8x128xf32> to vector<8x128xf32>
    %c0_5 = arith.constant 0 : index
    %c0_6 = arith.constant 0 : index
    %13 = vector.load %arg3[%c0_5, %c0_6] : memref<8x128xf32, #tpu.memory_space<vmem>>, vector<8x128xf32>
    tpu.vector_store %arg3[%c0_5, %c0_6], %12 {strides = array<i32>} : memref<8x128xf32, #tpu.memory_space<vmem>>, vector<8x128xf32>,
    return
  }
  func.func @transform_0(%arg0: i32) -> (i32, i32) {
    %c0_i32 = arith.constant 0 : i32
    %c0_i32_0 = arith.constant 0 : i32
    return %arg0, %c0_i32 : i32, i32
  }
  func.func @transform_1(%arg0: i32) -> (i32, i32) {
    %c0_i32 = arith.constant 0 : i32
    %c0_i32_0 = arith.constant 0 : i32
    return %arg0, %c0_i32 : i32, i32
  }
  func.func @transform_2(%arg0: i32) -> (i32, i32) {
    %c0_i32 = arith.constant 0 : i32
    %c0_i32_0 = arith.constant 0 : i32
    return %arg0, %c0_i32 : i32, i32
  }
}

</mosaic_0001>

<llo_original>
// kernel: tpu_custom_call.1
$region0: #{tpu_custom_call.1}
  #allocation0 [shape = 'u32[]', space=smem, size = 0x4, offset = 0x4, fixed_abs, tag = 'smem constant byte address 0x4 - core index']
  #allocation1 [shape = 'u32[72,128]{1,0:T(1,128)}', space=vmem, size = 0x9000, scoped, tag = 'internal scratch']
  %s0 = inlined_call_operand.hbm [shape: f32[16,128], index: 0, kind: input, shape index: {}]
  %s1 = inlined_call_operand.hbm [shape: f32[16,128], index: 1, kind: input, shape index: {}]
  %s2 = inlined_call_operand.hbm [shape: f32[16,128], index: 2, kind: output, shape index: {}]
  %s3 = sld [smem:[#allocation0]]
  $region49: #{tpu_custom_call.1} parent=0
    _
  %s5 = ssub.s32 1, %s3
  %s6 = scalar_select 0, %s5, %s3
  $region1: #{tpu_custom_call.1} parent=0
    #allocation2 [shape = 'u8[8192]{0}', space=vmem, size = 0x2000, scoped, tag = 'input window, operand 0']
    #allocation3 [shape = 's32[2]{0}', space=sflag, size = 0x8, scoped, tag = 'scoped memory for tpu_custom_call.1']
    #allocation4 [shape = 's32[2]{0}', space=sflag, size = 0x8, scoped, tag = 'scoped memory for tpu_custom_call.1']
    #allocation5 [shape = 'u8[8192]{0}', space=vmem, size = 0x2000, scoped, tag = 'input window, operand 1']
    #allocation6 [shape = 's32[2]{0}', space=sflag, size = 0x8, scoped, tag = 'scoped memory for tpu_custom_call.1']
    #allocation7 [shape = 'u8[8192]{0}', space=vmem, size = 0x2000, scoped, tag = 'output window, operand 0']
    %7 = vsyncpa [#allocation3], 0
    %s8 = scalar_lea.sflag [#allocation3], 1
    %9 = vsyncpa %s8, 0
    %10 = vsyncpa [#allocation6], 0
    %s11 = scalar_lea.sflag [#allocation6], 1
    %12 = vsyncpa %s11, 0
    %13 = vsyncpa [#allocation4], 0
    %s14 = scalar_lea.sflag [#allocation4], 1
    %15 = vsyncpa %s14, 0
    loop: start=0, step=1, limit=4
    $region2: #{tpu_custom_call.1} parent=1 // loop_pre_header
      _
    $region3: #{tpu_custom_call.1} parent=1 // loop_header
      %s17 = sphi 0, %s21
      %p18 = scmp.ge.s32.totalorder %s17, 4
      %s27 = sphi 0, %s29
      %s30 = sphi 0, %s27
      %s31 = sphi 0, %s30
      %s47 = sphi 0, %s31
      %s53 = sphi 0, %s55
      %s56 = sphi 0, %s53
      %s57 = sphi 0, %s56
      %s73 = sphi 0, %s57
      %s79 = sphi 0, %s81
      %s82 = sphi 0, %s79
      %s83 = sphi 0, %s82
      %s99 = sphi 0, %s83
    $region4: #{tpu_custom_call.1} parent=1 // loop_header_branch
      %20 = sbr.rel (%p18) target = $region8
    $region5: #{tpu_custom_call.1} parent=1 // loop_body
      %s22 = ssub.s32 %s17, 1
      %s23 = ssub.s32 %s17, 2
      %s24 = sadd.s32 %s17, 1
      %s25 = ssub.s32 %s17, %s24
      %p26 = scmp.eq.s32.totalorder %s25, 0
      %s28 = sadd.s32 %s27, 1
      %s29 = scalar_select %p26, %s27, %s28
      %p32 = pneg %p26
      %p33 = scmp.eq.s32.totalorder %s17, 1
      %p34 = por %p32, %p33
      %p35 = scmp.ne.s32.totalorder %s27, %s30
      %p36 = scmp.eq.s32.totalorder %s17, 0
      %p37 = por %p35, %p36
      %p38 = scmp.ne.s32.totalorder %s27, %s30
      %p39 = scmp.eq.s32.totalorder %s22, 1
      %p40 = por %p38, %p39
      %p41 = scmp.ne.s32.totalorder %s30, %s31
      %p42 = scmp.eq.s32.totalorder %s22, 0
      %p43 = por %p41, %p42
      %p44 = scmp.ne.s32.totalorder %s30, %s31
      %p45 = scmp.eq.s32.totalorder %s23, 1
      %p46 = por %p44, %p45
      %p48 = scmp.ne.s32.totalorder %s31, %s47
      %p49 = scmp.eq.s32.totalorder %s23, 0
      %p50 = por %p48, %p49
      %s51 = ssub.s32 %s17, %s24
      %p52 = scmp.eq.s32.totalorder %s51, 0
      %s54 = sadd.s32 %s53, 1
      %s55 = scalar_select %p52, %s53, %s54
      %p58 = pneg %p52
      %p59 = scmp.eq.s32.totalorder %s17, 1
      %p60 = por %p58, %p59
      %p61 = scmp.ne.s32.totalorder %s53, %s56
      %p62 = scmp.eq.s32.totalorder %s17, 0
      %p63 = por %p61, %p62
      %p64 = scmp.ne.s32.totalorder %s53, %s56
      %p65 = scmp.eq.s32.totalorder %s22, 1
      %p66 = por %p64, %p65
      %p67 = scmp.ne.s32.totalorder %s56, %s57
      %p68 = scmp.eq.s32.totalorder %s22, 0
      %p69 = por %p67, %p68
      %p70 = scmp.ne.s32.totalorder %s56, %s57
      %p71 = scmp.eq.s32.totalorder %s23, 1
      %p72 = por %p70, %p71
      %p74 = scmp.ne.s32.totalorder %s57, %s73
      %p75 = scmp.eq.s32.totalorder %s23, 0
      %p76 = por %p74, %p75
      %s77 = ssub.s32 %s17, %s24
      %p78 = scmp.eq.s32.totalorder %s77, 0
      %s80 = sadd.s32 %s79, 1
      %s81 = scalar_select %p78, %s79, %s80
      %p84 = pneg %p78
      %p85 = scmp.eq.s32.totalorder %s17, 1
      %p86 = por %p84, %p85
      %p87 = scmp.ne.s32.totalorder %s79, %s82
      %p88 = scmp.eq.s32.totalorder %s17, 0
      %p89 = por %p87, %p88
      %p90 = scmp.ne.s32.totalorder %s79, %s82
      %p91 = scmp.eq.s32.totalorder %s22, 1
      %p92 = por %p90, %p91
      %p93 = scmp.ne.s32.totalorder %s82, %s83
      %p94 = scmp.eq.s32.totalorder %s22, 0
      %p95 = por %p93, %p94
      %p96 = scmp.ne.s32.totalorder %s82, %s83
      %p97 = scmp.eq.s32.totalorder %s23, 1
      %p98 = por %p96, %p97
      %p100 = scmp.ne.s32.totalorder %s83, %s99
      %p101 = scmp.eq.s32.totalorder %s23, 0
      %p102 = por %p100, %p101
      %p103 = scmp.le.s32.totalorder 1, %s17
      %p104 = scmp.lt.s32.totalorder %s17, 3
      %p105 = pnand %p103, %p104
      %p106 = pneg %p105
      // Predicated region
      $region9: #{tpu_custom_call.1} parent=5 // pred_check
        _
      $region10: #{tpu_custom_call.1} parent=5 // pred_check_branch
        %108 = sbr.rel (%p105) target = $region12
      $region11: #{tpu_custom_call.1} parent=5 // pred_region
        %s109 = ssub.s32 %s17, 1
      $region12: #{tpu_custom_call.1} parent=5 // pred_fallthru
        _
      %p110 = scmp.lt.s32.totalorder %s17, 2
      // Predicated region
      $region13: #{tpu_custom_call.1} parent=5 // pred_check
        %p111 = pneg %p110
      $region14: #{tpu_custom_call.1} parent=5 // pred_check_branch
        %113 = sbr.rel (%p111) target = $region16
      $region15: #{tpu_custom_call.1} parent=5 // pred_region
        // Predicated region
        $region17: #{tpu_custom_call.1} parent=15 // pred_check
          %p114 = pneg %p37
        $region18: #{tpu_custom_call.1} parent=15 // pred_check_branch
          %116 = sbr.rel (%p114) target = $region20
        $region19: #{tpu_custom_call.1} parent=15 // pred_region
          %s117 = sand.u32 %s27, 1
          %s118 = scalar_lea.sflag [#allocation3], %s117
          %s119 = sand.u32 %s27, 1
          %s120 = smul.addr %s119, 8
          %s121 = scalar_lea.vmem [#allocation2], %s120
          %123 = vsyncadd %s118, 0
          %s124 = smul.addr %s17, 8
          %s125 = scalar_lea.hbm %s0, %s124
          %s127 = sshll.u32 %s125, 4
          %s128 = int_to_ptr.hbm [resolvable:$true] %s127
          %s129 = sshll.u32 %s121, 4
          %s130 = int_to_ptr.vmem [resolvable:$true] %s129
          %132 = dma.hbm_to_vmem [thread:$0]  %s128, 128, %s130, %s118
        $region20: #{tpu_custom_call.1} parent=15 // pred_fallthru
          _
        // Predicated region
        $region21: #{tpu_custom_call.1} parent=15 // pred_check
          %p133 = pneg %p63
        $region22: #{tpu_custom_call.1} parent=15 // pred_check_branch
          %135 = sbr.rel (%p133) target = $region24
        $region23: #{tpu_custom_call.1} parent=15 // pred_region
          %s136 = sand.u32 %s53, 1
          %s137 = scalar_lea.sflag [#allocation6], %s136
          %s138 = sand.u32 %s53, 1
          %s139 = smul.addr %s138, 8
          %s140 = scalar_lea.vmem [#allocation5], %s139
          %142 = vsyncadd %s137, 0
          %s143 = smul.addr %s17, 8
          %s144 = scalar_lea.hbm %s1, %s143
          %s146 = sshll.u32 %s144, 4
          %s147 = int_to_ptr.hbm [resolvable:$true] %s146
          %s148 = sshll.u32 %s140, 4
          %s149 = int_to_ptr.vmem [resolvable:$true] %s148
          %151 = dma.hbm_to_vmem [thread:$0]  %s147, 128, %s149, %s137
        $region24: #{tpu_custom_call.1} parent=15 // pred_fallthru
          _
      $region16: #{tpu_custom_call.1} parent=5 // pred_fallthru
        _
      %p152 = scmp.le.s32.totalorder 1, %s17
      %p153 = scmp.lt.s32.totalorder %s17, 3
      %p154 = pnand %p152, %p153
      %p155 = pneg %p154
      // Predicated region
      $region25: #{tpu_custom_call.1} parent=5 // pred_check
        _
      $region26: #{tpu_custom_call.1} parent=5 // pred_check_branch
        %157 = sbr.rel (%p154) target = $region28
      $region27: #{tpu_custom_call.1} parent=5 // pred_region
        %s158 = ssub.s32 %s17, 1
        %s159 = sand.u32 %s30, 1
        %s160 = scalar_lea.sflag [#allocation3], %s159
        %s161 = sand.u32 %s30, 1
        %s162 = smul.addr %s161, 8
        %s163 = scalar_lea.vmem [#allocation2], %s162
        // Predicated region
        $region29: #{tpu_custom_call.1} parent=27 // pred_check
          %p164 = pneg %p43
        $region30: #{tpu_custom_call.1} parent=27 // pred_check_branch
          %166 = sbr.rel (%p164) target = $region32
        $region31: #{tpu_custom_call.1} parent=27 // pred_region
          %168 = dma.done %s160, 128
        $region32: #{tpu_custom_call.1} parent=27 // pred_fallthru
          _
        %s169 = sand.u32 %s56, 1
        %s170 = scalar_lea.sflag [#allocation6], %s169
        %s171 = sand.u32 %s56, 1
        %s172 = smul.addr %s171, 8
        %s173 = scalar_lea.vmem [#allocation5], %s172
        // Predicated region
        $region33: #{tpu_custom_call.1} parent=27 // pred_check
          %p174 = pneg %p69
        $region34: #{tpu_custom_call.1} parent=27 // pred_check_branch
          %176 = sbr.rel (%p174) target = $region36
        $region35: #{tpu_custom_call.1} parent=27 // pred_region
          %178 = dma.done %s170, 128
        $region36: #{tpu_custom_call.1} parent=27 // pred_fallthru
          _
        %s179 = sand.u32 %s30, 1
        %s180 = scalar_lea.sflag [#allocation3], %s179
        %s181 = sand.u32 %s30, 1
        %s182 = smul.addr %s181, 8
        %s183 = scalar_lea.vmem [#allocation2], %s182
        %p184 = pneg %p43
        %p185 = pneg %p40
        %s186 = sand.u32 %s56, 1
        %s187 = scalar_lea.sflag [#allocation6], %s186
        %s188 = sand.u32 %s56, 1
        %s189 = smul.addr %s188, 8
        %s190 = scalar_lea.vmem [#allocation5], %s189
        %p191 = pneg %p69
        %p192 = pneg %p66
        %p193 = pneg %p95
        %p194 = pneg %p92
        %s195 = sand.u32 %s82, 1
        %s196 = scalar_lea.sflag [#allocation4], %s195
        %s197 = sand.u32 %s82, 1
        %s198 = smul.addr %s197, 8
        %s199 = scalar_lea.vmem [#allocation7], %s198
        %v200 = vld [vmem:[%s163] sm:$0xff]
        %v201 = vld [vmem:[%s173] sm:$0xff]
        %v202 = vsub.f32 %v200, %v201
        %v203 = vand.u32 2147483647, %v202
        %v204 = vmul.f32 %v203, -2.0
        %v205 = vmul.f32 %v204, 1.442695
        %v206 = vpow.pop %v205
        %v207 = vadd.f32 %v206, 1.0
        %v208 = vlog2.pop %v207
        %v209 = vmul.f32 %v208, 0.6931472
        %v210 = vmul.f32 -0.5, %v206
        %v211 = vadd.f32 %v210, 1.0
        %v212 = vmul.f32 %v211, %v206
        %v213 = vand.u32 2147483647, %v206
        %vm214 = vcmp.lt.f32.partialorder %v213, 0.0004427343
        %v215 = vsel %vm214, %v212, %v209
        %v216 = vadd.f32 %v203, %v215
        %v217 = vsub.f32 %v216, 0.6931472
        %v218 = vadd.f32 %v217, 0.0
        %219 = vst [vmem:[%s199] sm:$0xff] %v218
        %s220 = sand.u32 %s82, 1
        %s221 = scalar_lea.sflag [#allocation4], %s220
        %s222 = sand.u32 %s82, 1
        %s223 = smul.addr %s222, 8
        %s224 = scalar_lea.vmem [#allocation7], %s223
        // Predicated region
        $region37: #{tpu_custom_call.1} parent=27 // pred_check
          %p225 = pneg %p92
        $region38: #{tpu_custom_call.1} parent=27 // pred_check_branch
          %227 = sbr.rel (%p225) target = $region40
        $region39: #{tpu_custom_call.1} parent=27 // pred_region
          %229 = vsyncadd %s221, 0
          %s230 = smul.addr %s22, 8
          %s231 = scalar_lea.hbm %s2, %s230
          %s233 = sshll.u32 %s224, 4
          %s234 = int_to_ptr.vmem [resolvable:$true] %s233
          %s235 = sshll.u32 %s231, 4
          %s236 = int_to_ptr.hbm [resolvable:$true] %s235
          %238 = dma.vmem_to_hbm [thread:$0]  %s234, 128, %s236, %s221
        $region40: #{tpu_custom_call.1} parent=27 // pred_fallthru
          _
      $region28: #{tpu_custom_call.1} parent=5 // pred_fallthru
        _
      %p239 = scmp.le.s32.totalorder 2, %s17
      // Predicated region
      $region41: #{tpu_custom_call.1} parent=5 // pred_check
        %p240 = pneg %p239
      $region42: #{tpu_custom_call.1} parent=5 // pred_check_branch
        %242 = sbr.rel (%p240) target = $region44
      $region43: #{tpu_custom_call.1} parent=5 // pred_region
        %s243 = ssub.s32 %s17, 2
        // Predicated region
        $region45: #{tpu_custom_call.1} parent=43 // pred_check
          %p244 = pneg %p98
        $region46: #{tpu_custom_call.1} parent=43 // pred_check_branch
          %246 = sbr.rel (%p244) target = $region48
        $region47: #{tpu_custom_call.1} parent=43 // pred_region
          %s247 = sand.u32 %s83, 1
          %s248 = scalar_lea.sflag [#allocation4], %s247
          %s249 = sand.u32 %s83, 1
          %s250 = smul.addr %s249, 8
          %s251 = scalar_lea.vmem [#allocation7], %s250
          %253 = dma.done %s248, 128
        $region48: #{tpu_custom_call.1} parent=43 // pred_fallthru
          _
      $region44: #{tpu_custom_call.1} parent=5 // pred_fallthru
        _
    $region6: #{tpu_custom_call.1} parent=1 // loop_footer
      %s21 = sadd.s32 1, %s17
    $region7: #{tpu_custom_call.1} parent=1 // loop_footer_branch
      %16 = sbr.rel target = $region3
    $region8: #{tpu_custom_call.1} parent=1 // loop_exit
      _
    %254 = vsyncpa [#allocation3], 1
    %s255 = scalar_lea.sflag [#allocation3], 1
    %256 = vsyncpa %s255, 1
    %257 = vsyncpa [#allocation6], 1
    %s258 = scalar_lea.sflag [#allocation6], 1
    %259 = vsyncpa %s258, 1
    %260 = vsyncpa [#allocation4], 1
    %s261 = scalar_lea.sflag [#allocation4], 1
    %262 = vsyncpa %s261, 1

</llo_original>
